<compile_context>
chip_gen: v7x
topology: tpu7x:2x2x1
jax: 0.10.0
libtpu: 0.0.40
codegen_flags: <defaults>
</compile_context>

<pallas_src>
import jax
import jax.numpy as jnp
from jax.experimental import pallas as pl
from jax.experimental.pallas import tpu as pltpu


_ROW_TILE = 2048                  # row-tile cap (per-step overhead amortized)
_ROW_ALIGN = 16                   # bf16-safe sublane multiple
_MIN_STEPS = 2                    # keep >=2 grid steps so both v7x TCs get work
_VMEM_LIMIT = 32 * 1024 * 1024    # safe on v5e/v6e (128 MiB) and v7x (64 MiB per TC)


# ----------------------------------------------------------------------------
# small helpers
# ----------------------------------------------------------------------------
class _NS:
    def __init__(self, **kw):
        self.__dict__.update(kw)


def _round_up(x, m):
    return (x + m - 1) // m * m


def _pad_rows(x, n_pad):
    n = x.shape[0]
    if n == n_pad:
        return x
    return jnp.pad(x, ((0, n_pad - n), (0, 0)))


def _tile_rows(n, tile_cap=_ROW_TILE):
    """Pick a row tile: as large as the cap allows, but leaving >= _MIN_STEPS
    grid steps, aligned to 16 rows."""
    n_al = _round_up(max(n, _ROW_ALIGN), _ROW_ALIGN)
    want = _round_up((n_al + _MIN_STEPS - 1) // _MIN_STEPS, _ROW_ALIGN)
    tile = max(_ROW_ALIGN, min(tile_cap, want))
    n_pad = _round_up(n_al, tile)
    return tile, n_pad


def _row_tiled_call(kernel, row_args, param_args, out_cols, *, out_dtype=jnp.float32,
                    tile_cap=_ROW_TILE):
    """Run `kernel` over a 1-D grid of row tiles.

    row_args  : list of [N, C_i] arrays (dtype preserved), tiled along rows.
    param_args: weights / biases kept fully VMEM-resident (constant index_map).
    Rows are zero-padded to a multiple of the tile and the pad is sliced off.
    """
    n = row_args[0].shape[0]
    tile, n_pad = _tile_rows(n, tile_cap)
    row_args = [_pad_rows(a, n_pad) for a in row_args]

    in_specs = ([pl.BlockSpec((tile, a.shape[1]), lambda i: (i, 0)) for a in row_args]
                + [pl.BlockSpec(p.shape, lambda i: (0, 0)) for p in param_args])
    out_specs = pl.BlockSpec((tile, out_cols), lambda i: (i, 0))

    out = pl.pallas_call(
        kernel,
        out_shape=jax.ShapeDtypeStruct((n_pad, out_cols), out_dtype),
        grid=(n_pad // tile,),
        in_specs=in_specs,
        out_specs=out_specs,
        compiler_params=pltpu.CompilerParams(
            dimension_semantics=("parallel",),     # row tiles shard across TCs
            vmem_limit_bytes=_VMEM_LIMIT),
    )(*row_args, *param_args)
    return out[:n]


# ----------------------------------------------------------------------------
# Pallas kernels
# ----------------------------------------------------------------------------
def _pnet_stage1_kernel(x_ref, w1_ref, b1_ref, w2_ref, b2_ref, o_ref):
    """relu(relu(x @ w1 + b1) @ w2 + b2) -- PointNet per-point stage 1 (bf16 in, f32 acc)."""
    h = jnp.dot(x_ref[...], w1_ref[...], preferred_element_type=jnp.float32) + b1_ref[...]
    h = jnp.maximum(h, 0.0)
    h = jnp.dot(h.astype(jnp.bfloat16), w2_ref[...],
                preferred_element_type=jnp.float32) + b2_ref[...]
    o_ref[...] = jnp.maximum(h, 0.0).astype(o_ref.dtype)


def _pnet_stage2_kernel(h_ref, g_ref, w3a_ref, w3b_ref, b3_ref, w4_ref, b4_ref, o_ref):
    """Stage 2 with concat([h, gathered]) fused: W3 is split at init (w3a/w3b) so the
    (N, 2*gf) concat is never materialized and no in-kernel weight slicing happens."""
    t = (jnp.dot(h_ref[...], w3a_ref[...], preferred_element_type=jnp.float32)
         + jnp.dot(g_ref[...], w3b_ref[...], preferred_element_type=jnp.float32)
         + b3_ref[...])
    t = jnp.maximum(t, 0.0)
    t = jnp.dot(t.astype(jnp.bfloat16), w4_ref[...],
                preferred_element_type=jnp.float32) + b4_ref[...]
    o_ref[...] = jnp.maximum(t, 0.0).astype(o_ref.dtype)


def _make_decoder_kernel(nf_pos, nf_dir, use_sigmoid, rel_pos, off_scale, off_shift,
                         fold_affine):
    """Fused: NeRF embeds (batched sin/cos) + inp_embed concat (sum of per-slab
    matmuls against a row-split / row-permuted W1) + 4-layer IMNet (LeakyReLU 0.02)
    + sigmoid + offset scaling + ray update -> refined positions directly.

    Inputs: one bf16 feature slab [vox|rgb] and one f32 geometry slab [pos|ctr|dir]."""

    def lrelu(v):
        return jnp.where(v > 0, v, 0.02 * v)

    def kernel(feat_ref, geom_ref,
               wf_ref, wpx_ref, wdx_ref, wsin_ref, wcos_ref, b1_ref,
               w2_ref, b2_ref, w3_ref, b3_ref, w4_ref, b4_ref, o_ref):
        geom = geom_ref[...]                       # [T, 9] f32, static lane slices
        pos = geom[:, 0:3]
        ctr = geom[:, 3:6]
        dirs = geom[:, 6:9]
        enter = pos - ctr if rel_pos else pos

        h = (jnp.dot(feat_ref[...], wf_ref[...], preferred_element_type=jnp.float32)
             + jnp.dot(enter.astype(jnp.bfloat16), wpx_ref[...],
                       preferred_element_type=jnp.float32)
             + jnp.dot(dirs.astype(jnp.bfloat16), wdx_ref[...],
                       preferred_element_type=jnp.float32)
             + b1_ref[...])

        if nf_pos + nf_dir > 0:
            # One frequency-scaled block covering BOTH streams -> exactly one sin and
            # one cos EUP launch per tile; weight rows were permuted at init to match.
            scaled = ([jnp.float32(2.0 ** k) * enter for k in range(nf_pos)]
                      + [jnp.float32(2.0 ** k) * dirs for k in range(nf_dir)])
            s_blk = jnp.concatenate(scaled, axis=-1)          # [T, 3*(nf_pos+nf_dir)]
            h = (h
                 + jnp.dot(jnp.sin(s_blk).astype(jnp.bfloat16), wsin_ref[...],
                           preferred_element_type=jnp.float32)
                 + jnp.dot(jnp.cos(s_blk).astype(jnp.bfloat16), wcos_ref[...],
                           preferred_element_type=jnp.float32))

        h = lrelu(h)
        h = lrelu(jnp.dot(h.astype(jnp.bfloat16), w2_ref[...],
                          preferred_element_type=jnp.float32) + b2_ref[...])
        h = lrelu(jnp.dot(h.astype(jnp.bfloat16), w3_ref[...],
                          preferred_element_type=jnp.float32) + b3_ref[...])
        y = jnp.dot(h.astype(jnp.bfloat16), w4_ref[...],
                    preferred_element_type=jnp.float32) + b4_ref[...]
        if use_sigmoid:
            y = 1.0 / (1.0 + jnp.exp(-y))          # exact sigmoid (exp on EUP)
        if not fold_affine:
            y = y * off_scale + off_shift          # offset range affine
        o_ref[...] = pos + y * dirs                # refined positions directly

    return kernel


def _loss_kernel(p_ref, g_ref, o_ref, acc_ref):
    """Single pass over pred/gt: accumulates [sum|d|, sum(mask*||d||2), sum(mask)]."""
    i = pl.program_id(0)

    @pl.when(i == 0)
    def _():
        acc_ref[...] = jnp.zeros_like(acc_ref)

    p = p_ref[...]
    g = g_ref[...]
    d = p - g
    l1 = jnp.sum(jnp.abs(d))
    gmask = (jnp.sum(jnp.abs(g), axis=-1, keepdims=True) != 0).astype(jnp.float32)  # [T,1]
    l2 = jnp.sqrt(jnp.sum(d * d, axis=-1, keepdims=True))                            # [T,1]
    err_sum = jnp.sum(l2 * gmask)
    cnt = jnp.sum(gmask)
    acc_ref[...] += jnp.concatenate(
        [l1.reshape(1, 1), err_sum.reshape(1, 1), cnt.reshape(1, 1)], axis=-1)

    @pl.when(i == pl.num_programs(0) - 1)
    def _():
        o_ref[...] = acc_ref[...]


def pallas_loss_sums(pred, gt, tile_cap=_ROW_TILE):
    """Returns (1,3): [sum|pred-gt|, sum(mask * ||pred-gt||_2), sum(mask)]."""
    n, c = pred.shape
    tile, n_pad = _tile_rows(n, tile_cap)
    p = _pad_rows(pred.astype(jnp.float32), n_pad)   # zero pad rows: contribute 0
    g = _pad_rows(gt.astype(jnp.float32), n_pad)
    return pl.pallas_call(
        _loss_kernel,
        out_shape=jax.ShapeDtypeStruct((1, 3), jnp.float32),
        grid=(n_pad // tile,),
        in_specs=[pl.BlockSpec((tile, c), lambda i: (i, 0)),
                  pl.BlockSpec((tile, c), lambda i: (i, 0))],
        out_specs=pl.BlockSpec((1, 3), lambda i: (0, 0)),
        scratch_shapes=[pltpu.VMEM((1, 3), jnp.float32)],
        compiler_params=pltpu.CompilerParams(
            dimension_semantics=("arbitrary",),     # reduction axis
            vmem_limit_bytes=_VMEM_LIMIT),
    )(p, g)


# ----------------------------------------------------------------------------
# plain-JAX glue (data-dependent gather / scatter)
# ----------------------------------------------------------------------------
def roi_align_nhwc(feat_nhwc, bid, boxes_xyxy, out_size):
    # TODO(synk): torchvision roi_align (aligned=True, adaptive sampling_ratio) has no clean
    # Pallas equivalent (data-dependent gather); approximated in plain JAX with one bilinear
    # sample at each output-bin center.
    B, H, W, C = feat_nhwc.shape
    R = bid.shape[0]
    x1, y1, x2, y2 = (boxes_xyxy[:, i] for i in range(4))
    bw = (x2 - x1) / out_size
    bh = (y2 - y1) / out_size
    jj = jnp.arange(out_size, dtype=jnp.float32) + 0.5
    sx = x1[:, None] + jj[None, :] * bw[:, None] - 0.5  # aligned=True
    sy = y1[:, None] + jj[None, :] * bh[:, None] - 0.5
    yy = jnp.broadcast_to(sy[:, :, None], (R, out_size, out_size))
    xx = jnp.broadcast_to(sx[:, None, :], (R, out_size, out_size))
    y0 = jnp.floor(yy)
    x0 = jnp.floor(xx)
    wy = yy - y0
    wx = xx - x0

    def gather(iy, ix):
        iyc = jnp.clip(iy, 0, H - 1).astype(jnp.int32)
        ixc = jnp.clip(ix, 0, W - 1).astype(jnp.int32)
        vals = feat_nhwc[bid[:, None, None], iyc, ixc]  # [R, P, P, C]
        valid = (iy >= 0) & (iy <= H - 1) & (ix >= 0) & (ix <= W - 1)
        return vals * valid[..., None].astype(feat_nhwc.dtype)

    out = (gather(y0, x0) * ((1 - wy) * (1 - wx))[..., None]
           + gather(y0, x0 + 1) * ((1 - wy) * wx)[..., None]
           + gather(y0 + 1, x0) * (wy * (1 - wx))[..., None]
           + gather(y0 + 1, x0 + 1) * (wy * wx)[..., None])
    # flatten in torch NCHW order: [R, C, P, P] -> [R, C*P*P]
    return jnp.transpose(out, (0, 3, 1, 2)).reshape(R, -1)


def segment_maxpool(x, seg_ids, num_segments):
    # TODO(synk): torch_scatter scatter-max has no clean Pallas BlockSpec path; a fused
    # stage1->pool->gather->stage2 kernel (sort-by-voxel + scalar-prefetch offsets) is the
    # biggest remaining structural win and is left to plain-JAX segment_max here.
    pooled = jax.ops.segment_max(x.astype(jnp.float32), seg_ids, num_segments=num_segments)
    # inputs are post-ReLU (>=0); clears -inf of empty segments (matches scatter_max fill).
    return jnp.maximum(pooled, 0.0)


# ----------------------------------------------------------------------------
# RefineNet (Pallas version)
# ----------------------------------------------------------------------------
class RefineNetPallas:
    def __init__(self, opt, key):
        self.opt = opt
        self.build_model(key)

    def build_model(self, key):
        r = self.opt.refine
        m = self.opt.model
        nf_pos = r.multires
        nf_dir = r.multires_views
        embed_ch = 3 * (1 + 2 * nf_pos)
        embeddirs_ch = 3 * (1 + 2 * nf_dir)
        rgb_feat_ch = m.rgb_out * m.roi_out_bbox ** 2

        gf = r.pnet_gf
        dec_inp_dim = r.pnet_out + rgb_feat_ch + embed_ch + embeddirs_ch
        self.dec_inp_dim = dec_inp_dim

        def lin(key, fan_in, fan_out):
            kw, kb = jax.random.split(key)
            w = jax.random.normal(kw, (fan_in, fan_out), jnp.float32) * 0.1
            b = jax.random.normal(kb, (1, fan_out), jnp.float32) * 0.01
            return w, b

        bf16 = jnp.bfloat16
        keys = jax.random.split(key, 8)
        # PointNet2Stage: stage1 (pnet_in->gf->gf), stage2 (2gf->2gf->pnet_out)
        p_w1, self.p_b1 = lin(keys[0], r.pnet_in, gf)
        p_w2, self.p_b2 = lin(keys[1], gf, gf)
        p_w3, self.p_b3 = lin(keys[2], 2 * gf, 2 * gf)
        p_w4, self.p_b4 = lin(keys[3], 2 * gf, r.pnet_out)
        self.p_w1 = p_w1.astype(bf16)
        self.p_w2 = p_w2.astype(bf16)
        self.p_w3a = p_w3[:gf].astype(bf16)     # pre-split at init (no in-kernel slice)
        self.p_w3b = p_w3[gf:].astype(bf16)
        self.p_w4 = p_w4.astype(bf16)

        # IMNet offset decoder: dec_inp -> 4*gf -> 2*gf -> gf -> 1
        igf = r.imnet_gf
        i_w1, self.i_b1 = lin(keys[4], dec_inp_dim, 4 * igf)
        i_w2, self.i_b2 = lin(keys[5], 4 * igf, 2 * igf)
        i_w3, self.i_b3 = lin(keys[6], 2 * igf, igf)
        i_w4, i_b4 = lin(keys[7], igf, 1)

        off_lo = float(r.offset_range[0])
        off_hi = float(r.offset_range[1])
        fold_affine = not r.use_sigmoid
        if fold_affine:
            # Fold the offset-range affine into the last layer (free).
            i_w4 = i_w4 * (off_hi - off_lo)
            i_b4 = i_b4 * (off_hi - off_lo) + off_lo
        self.i_b4 = i_b4

        # Split/permute W1 rows by input slab [vox | rgb | pos_embed | dir_embed]
        # (matches the original inp_embed concat order) AND reorder the NeRF-embed rows
        # into the blocked [x | sin-block | cos-block] layout used by the kernel, so the
        # 94-wide concat and per-frequency lane shuffles are never materialized.
        o1 = r.pnet_out + rgb_feat_ch
        o2 = o1 + embed_ch
        pos_slab = i_w1[o1:o2]
        dir_slab = i_w1[o2:]

        def _sin_cos_rows(nf):
            sin_idx = [3 + 6 * k + j for k in range(nf) for j in range(3)]
            cos_idx = [3 + 6 * k + 3 + j for k in range(nf) for j in range(3)]
            return sin_idx, cos_idx

        sp, cp = _sin_cos_rows(nf_pos)
        sd, cd = _sin_cos_rows(nf_dir)

        self.i_w1_feat = i_w1[:o1].astype(bf16)          # [vox | rgb] rows
        self.i_w1_px = pos_slab[:3].astype(bf16)         # raw pos (x) rows
        self.i_w1_dx = dir_slab[:3].astype(bf16)         # raw dir (x) rows
        if nf_pos + nf_dir > 0:
            self.i_w1_sin = jnp.concatenate(
                [pos_slab[jnp.array(sp)], dir_slab[jnp.array(sd)]], axis=0).astype(bf16)
            self.i_w1_cos = jnp.concatenate(
                [pos_slab[jnp.array(cp)], dir_slab[jnp.array(cd)]], axis=0).astype(bf16)
        else:
            self.i_w1_sin = jnp.zeros((1, 4 * igf), bf16)   # unused placeholders
            self.i_w1_cos = jnp.zeros((1, 4 * igf), bf16)
        self.i_w2 = i_w2.astype(bf16)
        self.i_w3 = i_w3.astype(bf16)
        self.i_w4 = i_w4.astype(bf16)

        # Build kernels once (stable identity -> compile caching across forward_times).
        self._pnet1_kernel = _pnet_stage1_kernel
        self._pnet2_kernel = _pnet_stage2_kernel
        self._decoder_kernel = _make_decoder_kernel(
            nf_pos=nf_pos, nf_dir=nf_dir,
            use_sigmoid=r.use_sigmoid,
            rel_pos=(r.intersect_pos_type == 'rel'),
            off_scale=off_hi - off_lo, off_shift=off_lo,
            fold_affine=fold_affine)
        # TODO(synk): weights are re-DMA'd for each of the forward_times iterations;
        # cross-pallas_call weight prefetch (P10 futures) not implemented here.
        # TODO(synk): no custom_vjp is defined; this is a forward-only implementation.

    # -- PointNet2Stage ------------------------------------------------------
    def pnet_model(self, inp_feat, vox2point_idx, num_vox):
        x = inp_feat.astype(jnp.bfloat16)
        h = _row_tiled_call(self._pnet1_kernel, [x],
                            [self.p_w1, self.p_b1, self.p_w2, self.p_b2],
                            self.p_w2.shape[1], out_dtype=jnp.bfloat16)
        pooled = segment_maxpool(h, vox2point_idx, num_vox)
        gathered = pooled[vox2point_idx].astype(jnp.bfloat16)
        # stage 2: concat([h, gathered]) fused into the kernel (two refs + split W3)
        h2 = _row_tiled_call(self._pnet2_kernel, [h, gathered],
                             [self.p_w3a, self.p_w3b, self.p_b3, self.p_w4, self.p_b4],
                             self.p_w4.shape[1], out_dtype=jnp.bfloat16)
        occ_voxel_feat = segment_maxpool(h2, vox2point_idx, num_vox)
        return occ_voxel_feat

    # -- fused embed + IMNet + offset + ray update ---------------------------
    def decode_refine(self, vox_feat, rgb_feat, pred_pos, voxel_center, ray_dir):
        # Two merged input slabs instead of 5 narrow streams.
        feat = jnp.concatenate([vox_feat.astype(jnp.bfloat16),
                                rgb_feat.astype(jnp.bfloat16)], axis=-1)
        geom = jnp.concatenate([pred_pos, voxel_center, ray_dir],
                               axis=-1).astype(jnp.float32)
        return _row_tiled_call(
            self._decoder_kernel,
            [feat, geom],
            [self.i_w1_feat, self.i_w1_px, self.i_w1_dx, self.i_w1_sin, self.i_w1_cos,
             self.i_b1, self.i_w2, self.i_b2, self.i_w3, self.i_b3, self.i_w4, self.i_b4],
            3, out_dtype=jnp.float32)

    # -- one refinement step -------------------------------------------------
    def get_pred_refine(self, data_dict, pred_pos, exp_type, cur_iter):
        opt = self.opt
        bs, h, w = data_dict['bs'], data_dict['h'], data_dict['w']
        V = data_dict['voxel_bound'].shape[0]

        # TODO(synk): training-time random perturbation (np.random) skipped (opt.refine.perturb=False).

        # TODO(synk): pcl_aabb.forward is a custom CUDA op; emulated with a dense
        # point-in-AABB test + max-reduce (mirrors the scatter(reduce='max') semantics).
        # Points inside no voxel fall back to voxel 0 (the original falls back to the ray's
        # max_pair_id voxel, which is not part of this demo's data_dict).
        vb = data_dict['voxel_bound']  # [V, 6]
        inside = jnp.all(
            (pred_pos[:, None, :] >= vb[None, :, :3]) &
            (pred_pos[:, None, :] <= vb[None, :, 3:]), axis=-1)
        inside = inside & (data_dict['miss_bid'][:, None] == data_dict['occ_vox_bid'][None, :])
        cand = jnp.where(inside, jnp.arange(V, dtype=jnp.int32)[None, :], -1)
        end_voxel_id = jnp.clip(jnp.max(cand, axis=1), 0, V - 1).astype(jnp.int32)

        # ROIAlign RGB feature (plain-JAX glue)
        miss_img_ind = data_dict['miss_img_ind'].astype(jnp.float32)  # [N,2] (x, y)
        half = opt.model.roi_inp_bbox // 2
        ul = miss_img_ind - half
        br = miss_img_ind + half
        ul = jnp.stack([jnp.clip(ul[:, 0], 0.0, w - 1), jnp.clip(ul[:, 1], 0.0, h - 1)], -1)
        br = jnp.stack([jnp.clip(br[:, 0], 0.0, w - 1), jnp.clip(br[:, 1], 0.0, h - 1)], -1)
        boxes_xyxy = jnp.concatenate([ul, br], -1)
        full_rgb_feat_nhwc = jnp.transpose(data_dict['full_rgb_feat'], (0, 2, 3, 1))
        intersect_rgb_feat_end = roi_align_nhwc(
            full_rgb_feat_nhwc, data_dict['miss_bid'], boxes_xyxy, opt.model.roi_out_bbox)

        # per-ray RGB gather
        rgb_img_flat = jnp.transpose(data_dict['rgb_img'], (0, 2, 3, 1)).reshape(bs, -1, 3)
        miss_rgb = rgb_img_flat[data_dict['miss_bid'], data_dict['miss_flat_img_id']]

        end_voxel_bound = vb[end_voxel_id]
        end_voxel_center = (end_voxel_bound[:, :3] + end_voxel_bound[:, 3:]) / 2.0

        if opt.refine.pnet_pos_type == 'rel':
            pred_rel_xyz = pred_pos - end_voxel_center
            pred_inp = jnp.concatenate([pred_rel_xyz, miss_rgb], 1)
        else:
            pred_inp = jnp.concatenate([pred_pos, miss_rgb], 1)

        new_pred_inp = pred_inp
        new_end_voxel_id = end_voxel_id

        valid_v_rgb = data_dict['valid_rgb'][data_dict['valid_v_pid']]
        pnet_inp = jnp.concatenate([data_dict['valid_v_rel_coord'], valid_v_rgb], -1)

        final_pnet_inp = jnp.concatenate([pnet_inp, new_pred_inp], 0)
        final_revidx = jnp.concatenate([data_dict['revidx'], new_end_voxel_id], 0)

        occ_voxel_feat = self.pnet_model(final_pnet_inp, final_revidx, V)
        intersect_voxel_feat_end = occ_voxel_feat[end_voxel_id]

        # Fused decoder kernel: embeds, IMNet, sigmoid, offset range and ray update
        # all happen in-kernel; it directly returns the refined positions.
        pred_pos_refine = self.decode_refine(
            intersect_voxel_feat_end, intersect_rgb_feat_end,
            pred_pos, end_voxel_center, data_dict['miss_ray_dir'])
        return pred_pos_refine

    # -- loss (position loss + masked L2 err fused into one Pallas pass) ------
    def compute_loss(self, data_dict, exp_type, epoch):
        pred = data_dict['pred_pos_refine']
        gt = data_dict['gt_pos']
        n, c = pred.shape

        sums = pallas_loss_sums(pred, gt)           # [1,3]: l1_sum, masked_l2_sum, mask_count
        pos_loss = sums[0, 0] / jnp.float32(n * c)  # nn.L1Loss() == mean over all elements
        elem_num = sums[0, 2]
        err = jnp.where(elem_num == 0, 0.0, sums[0, 1] / jnp.maximum(elem_num, 1.0))

        # TODO(synk): surface-normal / smoothness losses need point_utils.get_surface_normal
        # (external module, not provided); their weights are 0 in this config so loss_net is exact.
        surf_norm_loss = jnp.float32(0.0)
        smooth_loss = jnp.float32(0.0)
        angle_err = jnp.float32(0.0)

        loss_net = self.opt.loss.pos_w * pos_loss

        return {'pos_loss': pos_loss, 'surf_norm_loss': surf_norm_loss,
                'smooth_loss': smooth_loss, 'loss_net': loss_net,
                'err': err, 'angle_err': angle_err}

    def forward(self, exp_type, epoch, data_dict):
        pred_pos_refine = None
        for cur_iter in range(self.opt.refine.forward_times):
            if cur_iter == 0:
                pred_pos_refine = self.get_pred_refine(
                    data_dict, data_dict['pred_pos'], exp_type, cur_iter)
            else:
                pred_pos_refine = self.get_pred_refine(
                    data_dict, pred_pos_refine, exp_type, cur_iter)
        data_dict['pred_pos_refine'] = pred_pos_refine
        loss_dict_refine = self.compute_loss(data_dict, exp_type, epoch)
        return data_dict, loss_dict_refine


# ----------------------------------------------------------------------------
# demo
# ----------------------------------------------------------------------------
if __name__ == "__main__":
    key = jax.random.PRNGKey(0)
    ks = jax.random.split(key, 16)

    bs, h, w = 2, 8, 8
    N_miss, V, N_valid, N_rgbpts = 32, 12, 48, 60

    opt = _NS(
        gpu_id=0,
        mask_type='all',
        model=_NS(rgb_embedding_type='ROIAlign', rgb_out=8, roi_out_bbox=2, roi_inp_bbox=2),
        refine=_NS(pos_encode=True, multires=2, multires_views=2,
                   pnet_model_type='twostage', pnet_in=6, pnet_out=32, pnet_gf=16,
                   offdec_type='IMNET', imnet_gf=16, use_sigmoid=True,
                   pnet_pos_type='rel', intersect_pos_type='rel',
                   offset_range=[-0.1, 0.1], forward_times=2,
                   perturb=False, perturb_prob=0.0, use_all_pix=True, n_iter=2),
        loss=_NS(pos_loss_type='single', hard_neg=False, hard_neg_ratio=0.3,
                 pos_w=1.0, surf_norm_w=0.0, smooth_w=0.0,
                 surf_norm_epo=0, smooth_epo=0),
    )

    # voxel AABBs
    centers = jax.random.uniform(ks[0], (V, 3), jnp.float32, 0.2, 0.8)
    voxel_bound = jnp.concatenate([centers - 0.25, centers + 0.25], -1)

    miss_flat_img_id = jax.random.randint(ks[1], (N_miss,), 0, h * w, jnp.int32)
    miss_img_x = (miss_flat_img_id % w).astype(jnp.int32)
    miss_img_y = (miss_flat_img_id // w).astype(jnp.int32)

    ray_dir = jax.random.normal(ks[2], (N_miss, 3), jnp.float32)
    ray_dir = ray_dir / jnp.linalg.norm(ray_dir, axis=-1, keepdims=True)

    data_dict = {
        'bs': bs, 'h': h, 'w': w,
        'pred_pos': jax.random.uniform(ks[3], (N_miss, 3), jnp.float32, 0.0, 1.0),
        'gt_pos': jax.random.uniform(ks[4], (N_miss, 3), jnp.float32, 0.0, 1.0),
        'miss_ray_dir': ray_dir,
        'miss_bid': jax.random.randint(ks[5], (N_miss,), 0, bs, jnp.int32),
        'miss_flat_img_id': miss_flat_img_id,
        'miss_img_ind': jnp.stack([miss_img_x, miss_img_y], -1),       # (x, y)
        'occ_vox_bid': jax.random.randint(ks[6], (V,), 0, bs, jnp.int32),
        'voxel_bound': voxel_bound,
        'full_rgb_feat': jax.random.normal(ks[7], (bs, opt.model.rgb_out, h, w), jnp.float32),
        'rgb_img': jax.random.uniform(ks[8], (bs, 3, h, w), jnp.float32),
        'valid_v_rel_coord': jax.random.normal(ks[9], (N_valid, 3), jnp.float32) * 0.1,
        'valid_rgb': jax.random.uniform(ks[10], (N_rgbpts, 3), jnp.float32),
        'valid_v_pid': jax.random.randint(ks[11], (N_valid,), 0, N_rgbpts, jnp.int32),
        'revidx': jax.random.randint(ks[12], (N_valid,), 0, V, jnp.int32),
    }

    net = RefineNetPallas(opt, ks[13])
    out_data, loss_dict = net.forward('train', 0, data_dict)

    jax.block_until_ready(out_data['pred_pos_refine'])
    jax.block_until_ready(loss_dict['loss_net'])
    print("KERNEL_OK")
</pallas_src>

<mosaic_0001>
module attributes {stable_mosaic.version = 11 : i64} {
  func.func @_pnet_stage1_kernel(%arg0: i32, %arg1: memref<48x6xbf16, #tpu.memory_space<vmem>>, %arg2: memref<6x16xbf16, #tpu.memory_space<vmem>>, %arg3: memref<1x16xf32, #tpu.memory_space<vmem>>, %arg4: memref<16x16xbf16, #tpu.memory_space<vmem>>, %arg5: memref<1x16xf32, #tpu.memory_space<vmem>>, %arg6: memref<48x16xbf16, #tpu.memory_space<vmem>>) attributes {dimension_semantics = [#tpu.dimension_semantics<parallel>], iteration_bounds = array<i64: 2>, scalar_prefetch = 0 : i64, scratch_operands = 0 : i64, tpu.core_type = #tpu.core_type<tc>, window_params = [{transform_indices = @transform_0, window_bounds = array<i64: 48, 6>}, {pipeline_mode = #tpu.pipeline_mode<synchronous>, transform_indices = @transform_1, window_bounds = array<i64: 6, 16>}, {pipeline_mode = #tpu.pipeline_mode<synchronous>, transform_indices = @transform_2, window_bounds = array<i64: 1, 16>}, {pipeline_mode = #tpu.pipeline_mode<synchronous>, transform_indices = @transform_3, window_bounds = array<i64: 16, 16>}, {pipeline_mode = #tpu.pipeline_mode<synchronous>, transform_indices = @transform_4, window_bounds = array<i64: 1, 16>}, {transform_indices = @transform_5, window_bounds = array<i64: 48, 16>}]} {
    %c0 = arith.constant 0 : index
    %c0_0 = arith.constant 0 : index
    %0 = vector.load %arg1[%c0, %c0_0] : memref<48x6xbf16, #tpu.memory_space<vmem>>, vector<48x6xbf16>
    %c0_1 = arith.constant 0 : index
    %c0_2 = arith.constant 0 : index
    %1 = vector.load %arg2[%c0_1, %c0_2] : memref<6x16xbf16, #tpu.memory_space<vmem>>, vector<6x16xbf16>
    %cst = arith.constant dense<0.000000e+00> : vector<48x16xf32>
    %2 = tpu.matmul %0, %1, %cst {dimension_numbers = #tpu.dot_dimension_numbers<[1], [0], [0], [1], [0, 0, 1, 1], [], []>} : vector<48x6xbf16>, vector<6x16xbf16>, vector<48x16xf32> -> vector<48x16xf32>
    %c0_3 = arith.constant 0 : index
    %c0_4 = arith.constant 0 : index
    %3 = vector.load %arg3[%c0_3, %c0_4] : memref<1x16xf32, #tpu.memory_space<vmem>>, vector<1x16xf32>
    %4 = vector.broadcast %3 : vector<1x16xf32> to vector<48x16xf32>
    %5 = arith.addf %2, %4 : vector<48x16xf32>
    %cst_5 = arith.constant 0.000000e+00 : f32
    %6 = vector.broadcast %cst_5 : f32 to vector<48x16xf32>
    %7 = arith.maximumf %5, %6 : vector<48x16xf32>
    %8 = arith.truncf %7 : vector<48x16xf32> to vector<48x16xbf16>
    %c0_6 = arith.constant 0 : index
    %c0_7 = arith.constant 0 : index
    %9 = vector.load %arg4[%c0_6, %c0_7] : memref<16x16xbf16, #tpu.memory_space<vmem>>, vector<16x16xbf16>
    %cst_8 = arith.constant dense<0.000000e+00> : vector<48x16xf32>
    %10 = tpu.matmul %8, %9, %cst_8 {dimension_numbers = #tpu.dot_dimension_numbers<[1], [0], [0], [1], [0, 0, 1, 1], [], []>} : vector<48x16xbf16>, vector<16x16xbf16>, vector<48x16xf32> -> vector<48x16xf32>
    %c0_9 = arith.constant 0 : index
    %c0_10 = arith.constant 0 : index
    %11 = vector.load %arg5[%c0_9, %c0_10] : memref<1x16xf32, #tpu.memory_space<vmem>>, vector<1x16xf32>
    %12 = vector.broadcast %11 : vector<1x16xf32> to vector<48x16xf32>
    %13 = arith.addf %10, %12 : vector<48x16xf32>
    %cst_11 = arith.constant 0.000000e+00 : f32
    %14 = vector.broadcast %cst_11 : f32 to vector<48x16xf32>
    %15 = arith.maximumf %13, %14 : vector<48x16xf32>
    %16 = arith.truncf %15 : vector<48x16xf32> to vector<48x16xbf16>
    %c0_12 = arith.constant 0 : index
    %c0_13 = arith.constant 0 : index
    %17 = vector.load %arg6[%c0_12, %c0_13] : memref<48x16xbf16, #tpu.memory_space<vmem>>, vector<48x16xbf16>
    tpu.vector_store %arg6[%c0_12, %c0_13], %16 {strides = array<i32>} : memref<48x16xbf16, #tpu.memory_space<vmem>>, vector<48x16xbf16>,
    return
  }
  func.func @transform_0(%arg0: i32) -> (i32, i32) {
    %c0_i32 = arith.constant 0 : i32
    %c0_i32_0 = arith.constant 0 : i32
    return %arg0, %c0_i32 : i32, i32
  }
  func.func @transform_1(%arg0: i32) -> (i32, i32) {
    %c0_i32 = arith.constant 0 : i32
    %c0_i32_0 = arith.constant 0 : i32
    %c0_i32_1 = arith.constant 0 : i32
    return %c0_i32, %c0_i32_0 : i32, i32
  }
  func.func @transform_2(%arg0: i32) -> (i32, i32) {
    %c0_i32 = arith.constant 0 : i32
    %c0_i32_0 = arith.constant 0 : i32
    %c0_i32_1 = arith.constant 0 : i32
    return %c0_i32, %c0_i32_0 : i32, i32
  }
  func.func @transform_3(%arg0: i32) -> (i32, i32) {
    %c0_i32 = arith.constant 0 : i32
    %c0_i32_0 = arith.constant 0 : i32
    %c0_i32_1 = arith.constant 0 : i32
    return %c0_i32, %c0_i32_0 : i32, i32
  }
  func.func @transform_4(%arg0: i32) -> (i32, i32) {
    %c0_i32 = arith.constant 0 : i32
    %c0_i32_0 = arith.constant 0 : i32
    %c0_i32_1 = arith.constant 0 : i32
    return %c0_i32, %c0_i32_0 : i32, i32
  }
  func.func @transform_5(%arg0: i32) -> (i32, i32) {
    %c0_i32 = arith.constant 0 : i32
    %c0_i32_0 = arith.constant 0 : i32
    return %arg0, %c0_i32 : i32, i32
  }
}

</mosaic_0001>

<llo_original>
// kernel: tpu_custom_call.1
$region0: #{tpu_custom_call.1}
  #allocation0 [shape = 'u32[]', space=smem, size = 0x4, offset = 0x4, fixed_abs, tag = 'smem constant byte address 0x4 - core index']
  #allocation1 [shape = 'u32[144,128]{1,0:T(1,128)}', space=vmem, size = 0x12000, scoped, tag = 'internal scratch']
  %s0 = inlined_call_operand.vmem [shape: bf16[96,6], index: 0, kind: input, shape index: {}]
  %s1 = inlined_call_operand.vmem [shape: bf16[6,16], index: 1, kind: input, shape index: {}]
  %s2 = inlined_call_operand.vmem [shape: f32[1,16], index: 2, kind: input, shape index: {}]
  %s3 = inlined_call_operand.vmem [shape: bf16[16,16], index: 3, kind: input, shape index: {}]
  %s4 = inlined_call_operand.vmem [shape: f32[1,16], index: 4, kind: input, shape index: {}]
  %s5 = inlined_call_operand.vmem [shape: bf16[96,16], index: 5, kind: output, shape index: {}]
  %s6 = sld [smem:[#allocation0]]
  $region53: #{tpu_custom_call.1} parent=0
    _
  %s8 = ssub.s32 1, %s6
  %s9 = scalar_select 0, %s8, %s6
  loop: start=0, step=1, limit=4
  $region2: #{tpu_custom_call.1} parent=0 // loop_pre_header
    _
  $region3: #{tpu_custom_call.1} parent=0 // loop_header
    %s11 = sphi 0, %s15
    %p12 = scmp.ge.s32.totalorder %s11, 4
    %s21 = sphi 0, %s23
    %s24 = sphi 0, %s21
    %s25 = sphi 0, %s24
    %s41 = sphi 0, %s25
    %s45 = sphi 0, %s45
    %s47 = sphi 0, %s45
    %s48 = sphi 0, %s47
    %s62 = sphi 0, %s48
    %s66 = sphi 0, %s66
    %s68 = sphi 0, %s66
    %s69 = sphi 0, %s68
    %s83 = sphi 0, %s69
    %s87 = sphi 0, %s87
    %s89 = sphi 0, %s87
    %s90 = sphi 0, %s89
    %s104 = sphi 0, %s90
    %s108 = sphi 0, %s108
    %s110 = sphi 0, %s108
    %s111 = sphi 0, %s110
    %s125 = sphi 0, %s111
    %s131 = sphi 0, %s133
    %s134 = sphi 0, %s131
    %s135 = sphi 0, %s134
    %s151 = sphi 0, %s135
  $region4: #{tpu_custom_call.1} parent=0 // loop_header_branch
    %14 = sbr.rel (%p12) target = $region8
  $region5: #{tpu_custom_call.1} parent=0 // loop_body
    %s16 = ssub.s32 %s11, 1
    %s17 = ssub.s32 %s11, 2
    %s18 = sadd.s32 %s11, 1
    %s19 = ssub.s32 %s11, %s18
    %p20 = scmp.eq.s32.totalorder %s19, 0
    %s22 = sadd.s32 %s21, 1
    %s23 = scalar_select %p20, %s21, %s22
    %p26 = pneg %p20
    %p27 = scmp.eq.s32.totalorder %s11, 1
    %p28 = por %p26, %p27
    %p29 = scmp.ne.s32.totalorder %s21, %s24
    %p30 = scmp.eq.s32.totalorder %s11, 0
    %p31 = por %p29, %p30
    %p32 = scmp.ne.s32.totalorder %s21, %s24
    %p33 = scmp.eq.s32.totalorder %s16, 1
    %p34 = por %p32, %p33
    %p35 = scmp.ne.s32.totalorder %s24, %s25
    %p36 = scmp.eq.s32.totalorder %s16, 0
    %p37 = por %p35, %p36
    %p38 = scmp.ne.s32.totalorder %s24, %s25
    %p39 = scmp.eq.s32.totalorder %s17, 1
    %p40 = por %p38, %p39
    %p42 = scmp.ne.s32.totalorder %s25, %s41
    %p43 = scmp.eq.s32.totalorder %s17, 0
    %p44 = por %p42, %p43
    %s46 = sadd.s32 %s45, 1
    %p49 = scmp.eq.s32.totalorder %s11, 1
    %p50 = scmp.ne.s32.totalorder %s45, %s47
    %p51 = scmp.eq.s32.totalorder %s11, 0
    %p52 = por %p50, %p51
    %p53 = scmp.ne.s32.totalorder %s45, %s47
    %p54 = scmp.eq.s32.totalorder %s16, 1
    %p55 = por %p53, %p54
    %p56 = scmp.ne.s32.totalorder %s47, %s48
    %p57 = scmp.eq.s32.totalorder %s16, 0
    %p58 = por %p56, %p57
    %p59 = scmp.ne.s32.totalorder %s47, %s48
    %p60 = scmp.eq.s32.totalorder %s17, 1
    %p61 = por %p59, %p60
    %p63 = scmp.ne.s32.totalorder %s48, %s62
    %p64 = scmp.eq.s32.totalorder %s17, 0
    %p65 = por %p63, %p64
    %s67 = sadd.s32 %s66, 1
    %p70 = scmp.eq.s32.totalorder %s11, 1
    %p71 = scmp.ne.s32.totalorder %s66, %s68
    %p72 = scmp.eq.s32.totalorder %s11, 0
    %p73 = por %p71, %p72
    %p74 = scmp.ne.s32.totalorder %s66, %s68
    %p75 = scmp.eq.s32.totalorder %s16, 1
    %p76 = por %p74, %p75
    %p77 = scmp.ne.s32.totalorder %s68, %s69
    %p78 = scmp.eq.s32.totalorder %s16, 0
    %p79 = por %p77, %p78
    %p80 = scmp.ne.s32.totalorder %s68, %s69
    %p81 = scmp.eq.s32.totalorder %s17, 1
    %p82 = por %p80, %p81
    %p84 = scmp.ne.s32.totalorder %s69, %s83
    %p85 = scmp.eq.s32.totalorder %s17, 0
    %p86 = por %p84, %p85
    %s88 = sadd.s32 %s87, 1
    %p91 = scmp.eq.s32.totalorder %s11, 1
    %p92 = scmp.ne.s32.totalorder %s87, %s89
    %p93 = scmp.eq.s32.totalorder %s11, 0
    %p94 = por %p92, %p93
    %p95 = scmp.ne.s32.totalorder %s87, %s89
    %p96 = scmp.eq.s32.totalorder %s16, 1
    %p97 = por %p95, %p96
    %p98 = scmp.ne.s32.totalorder %s89, %s90
    %p99 = scmp.eq.s32.totalorder %s16, 0
    %p100 = por %p98, %p99
    %p101 = scmp.ne.s32.totalorder %s89, %s90
    %p102 = scmp.eq.s32.totalorder %s17, 1
    %p103 = por %p101, %p102
    %p105 = scmp.ne.s32.totalorder %s90, %s104
    %p106 = scmp.eq.s32.totalorder %s17, 0
    %p107 = por %p105, %p106
    %s109 = sadd.s32 %s108, 1
    %p112 = scmp.eq.s32.totalorder %s11, 1
    %p113 = scmp.ne.s32.totalorder %s108, %s110
    %p114 = scmp.eq.s32.totalorder %s11, 0
    %p115 = por %p113, %p114
    %p116 = scmp.ne.s32.totalorder %s108, %s110
    %p117 = scmp.eq.s32.totalorder %s16, 1
    %p118 = por %p116, %p117
    %p119 = scmp.ne.s32.totalorder %s110, %s111
    %p120 = scmp.eq.s32.totalorder %s16, 0
    %p121 = por %p119, %p120
    %p122 = scmp.ne.s32.totalorder %s110, %s111
    %p123 = scmp.eq.s32.totalorder %s17, 1
    %p124 = por %p122, %p123
    %p126 = scmp.ne.s32.totalorder %s111, %s125
    %p127 = scmp.eq.s32.totalorder %s17, 0
    %p128 = por %p126, %p127
    %s129 = ssub.s32 %s11, %s18
    %p130 = scmp.eq.s32.totalorder %s129, 0
    %s132 = sadd.s32 %s131, 1
    %s133 = scalar_select %p130, %s131, %s132
    %p136 = pneg %p130
    %p137 = scmp.eq.s32.totalorder %s11, 1
    %p138 = por %p136, %p137
    %p139 = scmp.ne.s32.totalorder %s131, %s134
    %p140 = scmp.eq.s32.totalorder %s11, 0
    %p141 = por %p139, %p140
    %p142 = scmp.ne.s32.totalorder %s131, %s134
    %p143 = scmp.eq.s32.totalorder %s16, 1
    %p144 = por %p142, %p143
    %p145 = scmp.ne.s32.totalorder %s134, %s135
    %p146 = scmp.eq.s32.totalorder %s16, 0
    %p147 = por %p145, %p146
    %p148 = scmp.ne.s32.totalorder %s134, %s135
    %p149 = scmp.eq.s32.totalorder %s17, 1
    %p150 = por %p148, %p149
    %p152 = scmp.ne.s32.totalorder %s135, %s151
    %p153 = scmp.eq.s32.totalorder %s17, 0
    %p154 = por %p152, %p153
    %p155 = scmp.le.s32.totalorder 1, %s11
    %p156 = scmp.lt.s32.totalorder %s11, 3
    %p157 = pnand %p155, %p156
    %p158 = pneg %p157
    // Predicated region
    $region9: #{tpu_custom_call.1} parent=5 // pred_check
      _
    $region10: #{tpu_custom_call.1} parent=5 // pred_check_branch
      %160 = sbr.rel (%p157) target = $region12
    $region11: #{tpu_custom_call.1} parent=5 // pred_region
      %s161 = ssub.s32 %s11, 1
      // Predicated region
      $region13: #{tpu_custom_call.1} parent=11 // pred_check
        %p162 = pneg %p58
      $region14: #{tpu_custom_call.1} parent=11 // pred_check_branch
        %164 = sbr.rel (%p162) target = $region16
      $region15: #{tpu_custom_call.1} parent=11 // pred_region
        _
      $region16: #{tpu_custom_call.1} parent=11 // pred_fallthru
        _
      // Predicated region
      $region17: #{tpu_custom_call.1} parent=11 // pred_check
        %p165 = pneg %p79
      $region18: #{tpu_custom_call.1} parent=11 // pred_check_branch
        %167 = sbr.rel (%p165) target = $region20
      $region19: #{tpu_custom_call.1} parent=11 // pred_region
        _
      $region20: #{tpu_custom_call.1} parent=11 // pred_fallthru
        _
      // Predicated region
      $region21: #{tpu_custom_call.1} parent=11 // pred_check
        %p168 = pneg %p100
      $region22: #{tpu_custom_call.1} parent=11 // pred_check_branch
        %170 = sbr.rel (%p168) target = $region24
      $region23: #{tpu_custom_call.1} parent=11 // pred_region
        _
      $region24: #{tpu_custom_call.1} parent=11 // pred_fallthru
        _
      // Predicated region
      $region25: #{tpu_custom_call.1} parent=11 // pred_check
        %p171 = pneg %p121
      $region26: #{tpu_custom_call.1} parent=11 // pred_check_branch
        %173 = sbr.rel (%p171) target = $region28
      $region27: #{tpu_custom_call.1} parent=11 // pred_region
        _
      $region28: #{tpu_custom_call.1} parent=11 // pred_fallthru
        _
    $region12: #{tpu_custom_call.1} parent=5 // pred_fallthru
      _
    %p174 = scmp.lt.s32.totalorder %s11, 2
    // Predicated region
    $region29: #{tpu_custom_call.1} parent=5 // pred_check
      %p175 = pneg %p174
    $region30: #{tpu_custom_call.1} parent=5 // pred_check_branch
      %177 = sbr.rel (%p175) target = $region32
    $region31: #{tpu_custom_call.1} parent=5 // pred_region
      // Predicated region
      $region33: #{tpu_custom_call.1} parent=31 // pred_check
        %p178 = pneg %p31
      $region34: #{tpu_custom_call.1} parent=31 // pred_check_branch
        %180 = sbr.rel (%p178) target = $region36
      $region35: #{tpu_custom_call.1} parent=31 // pred_region
        %s181 = smul.u32 6, %s11
        %p182 = scmp.lt.s32.totalorder %s181, 11
        %s183 = scalar_select %p182, %s181, 11
        %s184 = smul.addr %s183, 4
        %s185 = scalar_lea.vmem %s0, %s184
        %s186 = smul.u32 6, %s11
      $region36: #{tpu_custom_call.1} parent=31 // pred_fallthru
        _
    $region32: #{tpu_custom_call.1} parent=5 // pred_fallthru
      _
    %p187 = scmp.le.s32.totalorder 1, %s11
    %p188 = scmp.lt.s32.totalorder %s11, 3
    %p189 = pnand %p187, %p188
    %p190 = pneg %p189
    // Predicated region
    $region37: #{tpu_custom_call.1} parent=5 // pred_check
      _
    $region38: #{tpu_custom_call.1} parent=5 // pred_check_branch
      %192 = sbr.rel (%p189) target = $region40
    $region39: #{tpu_custom_call.1} parent=5 // pred_region
      %s193 = ssub.s32 %s11, 1
      %s194 = smul.u32 6, %s16
      %p195 = scmp.lt.s32.totalorder %s194, 11
      %s196 = scalar_select %p195, %s194, 11
      %s197 = smul.addr %s196, 4
      %s198 = scalar_lea.vmem %s0, %s197
      %p199 = pneg %p37
      %p200 = pneg %p34
      %p201 = pneg %p58
      %p202 = pneg %p55
      %p203 = pneg %p79
      %p204 = pneg %p76
      %p205 = pneg %p100
      %p206 = pneg %p97
      %p207 = pneg %p121
      %p208 = pneg %p118
      %p209 = pneg %p147
      %p210 = pneg %p144
      %s211 = smul.u32 6, %s16
      %p212 = scmp.lt.s32.totalorder %s211, 11
      %s213 = scalar_select %p212, %s211, 11
      %s214 = smul.addr %s213, 4
      %s215 = scalar_lea.vmem %s5, %s214
      %s216 = smul.u32 6, %s16
      %p217 = scmp.lt.s32.totalorder %s216, 11
      %s218 = scalar_select %p217, %s216, 11
      %s219 = smul.addr %s218, 4
      %s220 = scalar_lea.vmem %s0, %s219
      %s221 = smul.u32 6, %s16
      %s222 = smul.u32 6, %s16
      %p223 = scmp.lt.s32.totalorder %s222, 11
      %s224 = scalar_select %p223, %s222, 11
      %s225 = smul.addr %s224, 4
      %s226 = scalar_lea.vmem %s5, %s225
      %s227 = smul.u32 6, %s16
      %v229 = vld [vmem:[%s220] sm:$0xf]
      %v230 = vld [vmem:[%s220 + $0x4] sm:$0xf]
      %v231 = vld [vmem:[%s220 + $0x8] sm:$0xf]
      %v232 = vld [vmem:[%s220 + $0xc] sm:$0xf]
      %v233 = vld [vmem:[%s220 + $0x10] sm:$0xf]
      %v234 = vld [vmem:[%s220 + $0x14] sm:$0xf]
      %v235 = vld [vmem:[%s1] sm:$0x7]
      %v236 = vld [vmem:[%s2] sm:$0x1]
      %v238 = vlaneseq
      %v239 = vshrl.u32 %v238, 7
      %v240 = vsub.s32 0, %v239
      %v241 = vrot.slane %v236, %v240
      %v249 = vunpack.c.l.b16 %v229
      %v250 = vunpack.c.l.b16 %v230
      %v251 = vunpack.c.l.b16 %v231
      %v252 = vunpack.c.l.b16 %v232
      %v253 = vunpack.c.l.b16 %v233
      %v254 = vunpack.c.l.b16 %v234
      %v255 = vpack.c.b16 %v250, %v249
      %v256 = vpack.c.b16 %v252, %v251
      %v257 = vpack.c.b16 %v254, %v253
      %vm258 = vcmask 48128
      %v260 = vsel %vm258, %v255, 0
      %v263 = vsel %vm258, %v256, 0
      %v266 = vsel %vm258, %v257, 0
      %vm268 = vcmask 1042432
      %v270 = vsel %vm268, %v235, 0
      %272 = vmatprep.subr.bf16.mxu0 0
      %273 = vmatpush1.bf16.msra.mxu0 %v270
      %274 = vmatprep.subr.bf16.mxu0 0
      %275 = vmatpush1.bf16.msra.mxu0 0
      %276 = vmatprep.subr.bf16.mxu0 0
      %277 = vmatpush1.bf16.msra.mxu0 0
      %278 = vmatprep.subr.bf16.mxu0 0
      %279 = vmatpush1.bf16.msra.mxu0 0
      %280 = vmatprep.subr.bf16.mxu0 0
      %281 = vmatpush1.bf16.msra.mxu0 0
      %282 = vmatprep.subr.bf16.mxu0 0
      %283 = vmatpush1.bf16.msra.mxu0 0
      %284 = vmatprep.subr.bf16.mxu0 0
      %285 = vmatpush1.bf16.msra.mxu0 0
      %286 = vmatprep.subr.bf16.mxu0 0
      %287 = vmatpush1.bf16.msra.mxu0 0
      %288 = vmatprep.subr.bf16.mxu0 0
      %289 = vmatpush1.bf16.msra.mxu0 0
      %290 = vmatprep.subr.bf16.mxu0 0
      %291 = vmatpush1.bf16.msra.mxu0 0
      %292 = vmatprep.subr.bf16.mxu0 0
      %293 = vmatpush1.bf16.msra.mxu0 0
      %294 = vmatprep.subr.bf16.mxu0 0
      %295 = vmatpush1.bf16.msra.mxu0 0
      %296 = vmatprep.subr.bf16.mxu0 0
      %297 = vmatpush1.bf16.msra.mxu0 0
      %298 = vmatprep.subr.bf16.mxu0 0
      %299 = vmatpush1.bf16.msra.mxu0 0
      %300 = vmatprep.subr.bf16.mxu0 0
      %301 = vmatpush1.bf16.msra.mxu0 0
      %302 = vmatprep.subr.bf16.mxu0 0
      %303 = vmatpush1.bf16.msra.mxu0 0
      %304 = vmatprep.mubr.bf16.mxu0 0
      %305 = vmatmul.mubr.bf16.gmra.mrb[0].mxu0 %v260
      %v306 = vpop.f32.mrb[0].mxu0
      %v307 = vadd.f32 %v241, %v306
      %v308 = vpop.f32.mrb[0].mxu0
      %v309 = vpop.f32.mrb[0].mxu0
      %v310 = vadd.f32 %v241, %v309
      %v311 = vpop.f32.mrb[0].mxu0
      %312 = vmatprep.mubr.bf16.mxu0 0
      %313 = vmatmul.mubr.bf16.gmra.mrb[0].mxu0 %v263
      %v314 = vpop.f32.mrb[0].mxu0
      %v315 = vadd.f32 %v241, %v314
      %v316 = vpop.f32.mrb[0].mxu0
      %v317 = vpop.f32.mrb[0].mxu0
      %v318 = vadd.f32 %v241, %v317
      %v319 = vpop.f32.mrb[0].mxu0
      %320 = vmatprep.mubr.bf16.mxu0 0
      %321 = vmatmul.mubr.bf16.gmra.mrb[0].mxu0 %v266
      %v322 = vpop.f32.mrb[0].mxu0
      %v323 = vadd.f32 %v241, %v322
      %v324 = vpop.f32.mrb[0].mxu0
      %v325 = vpop.f32.mrb[0].mxu0
      %v326 = vadd.f32 %v241, %v325
      %v327 = vpop.f32.mrb[0].mxu0
      %328 = vdwg.mxu0
      %v329 = vmax.f32 %v307, 0.0
      %v330 = vmax.f32 %v310, 0.0
      %v331 = vmax.f32 %v315, 0.0
      %v332 = vmax.f32 %v318, 0.0
      %v333 = vmax.f32 %v323, 0.0
      %v334 = vmax.f32 %v326, 0.0
      %v335 = vpack.c.bf16 %v330, %v329
      %v336 = vpack.c.bf16 %v332, %v331
      %v337 = vpack.c.bf16 %v334, %v333
      %v338 = vld [vmem:[%s3] sm:$0xf]
      %v339 = vld [vmem:[%s3 + $0x4] sm:$0xf]
      %v340 = vld [vmem:[%s4] sm:$0x1]
      %v342 = vlaneseq
      %v343 = vshrl.u32 %v342, 7
      %v344 = vsub.s32 0, %v343
      %v345 = vrot.slane %v340, %v344
      %v349 = vunpack.c.l.b16 %v338
      %v350 = vunpack.c.l.b16 %v339
      %v351 = vpack.c.b16 %v350, %v349
      %vm353 = vcmask 130048
      %v355 = vsel %vm353, %v335, 0
      %v358 = vsel %vm353, %v336, 0
      %v361 = vsel %vm353, %v337, 0
      %363 = vmatprep.subr.bf16.mxu0 0
      %364 = vmatpush1.bf16.msra.mxu0 %v351
      %365 = vmatprep.subr.bf16.mxu0 0
      %366 = vmatpush1.bf16.msra.mxu0 0
      %367 = vmatprep.subr.bf16.mxu0 0
      %368 = vmatpush1.bf16.msra.mxu0 0
      %369 = vmatprep.subr.bf16.mxu0 0
      %370 = vmatpush1.bf16.msra.mxu0 0
      %371 = vmatprep.subr.bf16.mxu0 0
      %372 = vmatpush1.bf16.msra.mxu0 0
      %373 = vmatprep.subr.bf16.mxu0 0
      %374 = vmatpush1.bf16.msra.mxu0 0
      %375 = vmatprep.subr.bf16.mxu0 0
      %376 = vmatpush1.bf16.msra.mxu0 0
      %377 = vmatprep.subr.bf16.mxu0 0
      %378 = vmatpush1.bf16.msra.mxu0 0
      %379 = vmatprep.subr.bf16.mxu0 0
      %380 = vmatpush1.bf16.msra.mxu0 0
      %381 = vmatprep.subr.bf16.mxu0 0
      %382 = vmatpush1.bf16.msra.mxu0 0
      %383 = vmatprep.subr.bf16.mxu0 0
      %384 = vmatpush1.bf16.msra.mxu0 0
      %385 = vmatprep.subr.bf16.mxu0 0
      %386 = vmatpush1.bf16.msra.mxu0 0
      %387 = vmatprep.subr.bf16.mxu0 0
      %388 = vmatpush1.bf16.msra.mxu0 0
      %389 = vmatprep.subr.bf16.mxu0 0
      %390 = vmatpush1.bf16.msra.mxu0 0
      %391 = vmatprep.subr.bf16.mxu0 0
      %392 = vmatpush1.bf16.msra.mxu0 0
      %393 = vmatprep.subr.bf16.mxu0 0
      %394 = vmatpush1.bf16.msra.mxu0 0
      %395 = vmatprep.mubr.bf16.mxu0 0
      %396 = vmatmul.mubr.bf16.gmra.mrb[0].mxu0 %v355
      %v397 = vpop.f32.mrb[0].mxu0
      %v398 = vadd.f32 %v345, %v397
      %v399 = vpop.f32.mrb[0].mxu0
      %v400 = vpop.f32.mrb[0].mxu0
      %v401 = vadd.f32 %v345, %v400
      %v402 = vpop.f32.mrb[0].mxu0
      %403 = vmatprep.mubr.bf16.mxu0 0
      %404 = vmatmul.mubr.bf16.gmra.mrb[0].mxu0 %v358
      %v405 = vpop.f32.mrb[0].mxu0
      %v406 = vadd.f32 %v345, %v405
      %v407 = vpop.f32.mrb[0].mxu0
      %v408 = vpop.f32.mrb[0].mxu0
      %v409 = vadd.f32 %v345, %v408
      %v410 = vpop.f32.mrb[0].mxu0
      %411 = vmatprep.mubr.bf16.mxu0 0
      %412 = vmatmul.mubr.bf16.gmra.mrb[0].mxu0 %v361
      %v413 = vpop.f32.mrb[0].mxu0
      %v414 = vadd.f32 %v345, %v413
      %v415 = vpop.f32.mrb[0].mxu0
      %v416 = vpop.f32.mrb[0].mxu0
      %v417 = vadd.f32 %v345, %v416
      %v418 = vpop.f32.mrb[0].mxu0
      %419 = vdwg.mxu0
      %v420 = vmax.f32 %v398, 0.0
      %v421 = vmax.f32 %v401, 0.0
      %v422 = vmax.f32 %v406, 0.0
      %v423 = vmax.f32 %v409, 0.0
      %v424 = vmax.f32 %v414, 0.0
      %v425 = vmax.f32 %v417, 0.0
      %v426 = vpack.c.bf16 %v421, %v420
      %v427 = vpack.c.bf16 %v423, %v422
      %v428 = vpack.c.bf16 %v425, %v424
      %v432 = vunpack.c.l.b16 %v426
      %v433 = vunpack.c.h.b16 %v426
      %v434 = vunpack.c.l.b16 %v427
      %v435 = vunpack.c.h.b16 %v427
      %v436 = vunpack.c.l.b16 %v428
      %v437 = vunpack.c.h.b16 %v428
      %v438 = vpack.c.b16 %v432, %v432
      %v439 = vpack.c.b16 %v433, %v433
      %v440 = vpack.c.b16 %v434, %v434
      %v441 = vpack.c.b16 %v435, %v435
      %v442 = vpack.c.b16 %v436, %v436
      %v443 = vpack.c.b16 %v437, %v437
      %vm450 = vcmask 125952
      %451 = vst.msk [vmem:[%s226] sm:$0xf] %vm450, %v438
      %452 = vst.msk [vmem:[%s226 + $0x4] sm:$0xf] %vm450, %v439
      %453 = vst.msk [vmem:[%s226 + $0x8] sm:$0xf] %vm450, %v440
      %454 = vst.msk [vmem:[%s226 + $0xc] sm:$0xf] %vm450, %v441
      %455 = vst.msk [vmem:[%s226 + $0x10] sm:$0xf] %vm450, %v442
      %456 = vst.msk [vmem:[%s226 + $0x14] sm:$0xf] %vm450, %v443
      %s457 = smul.u32 6, %s16
      %p458 = scmp.lt.s32.totalorder %s457, 11
      %s459 = scalar_select %p458, %s457, 11
      %s460 = smul.addr %s459, 4
      %s461 = scalar_lea.vmem %s5, %s460
      // Predicated region
      $region41: #{tpu_custom_call.1} parent=39 // pred_check
        %p462 = pneg %p144
      $region42: #{tpu_custom_call.1} parent=39 // pred_check_branch
        %464 = sbr.rel (%p462) target = $region44
      $region43: #{tpu_custom_call.1} parent=39 // pred_region
        %s465 = smul.u32 6, %s16
      $region44: #{tpu_custom_call.1} parent=39 // pred_fallthru
        _
    $region40: #{tpu_custom_call.1} parent=5 // pred_fallthru
      _
    %p466 = scmp.le.s32.totalorder 2, %s11
    // Predicated region
    $region45: #{tpu_custom_call.1} parent=5 // pred_check
      %p467 = pneg %p466
    $region46: #{tpu_custom_call.1} parent=5 // pred_check_branch
      %469 = sbr.rel (%p467) target = $region48
    $region47: #{tpu_custom_call.1} parent=5 // pred_region
      %s470 = ssub.s32 %s11, 2
      // Predicated region
      $region49: #{tpu_custom_call.1} parent=47 // pred_check
        %p471 = pneg %p150
      $region50: #{tpu_custom_call.1} parent=47 // pred_check_branch
        %473 = sbr.rel (%p471) target = $region52
      $region51: #{tpu_custom_call.1} parent=47 // pred_region
        %s474 = smul.u32 6, %s17
        %p475 = scmp.lt.s32.totalorder %s474, 11
        %s476 = scalar_select %p475, %s474, 11
        %s477 = smul.addr %s476, 4
        %s478 = scalar_lea.vmem %s5, %s477
      $region52: #{tpu_custom_call.1} parent=47 // pred_fallthru
        _
    $region48: #{tpu_custom_call.1} parent=5 // pred_fallthru
      _
  $region6: #{tpu_custom_call.1} parent=0 // loop_footer
    %s15 = sadd.s32 1, %s11
  $region7: #{tpu_custom_call.1} parent=0 // loop_footer_branch
    %10 = sbr.rel target = $region3
  $region8: #{tpu_custom_call.1} parent=0 // loop_exit
    _

</llo_original>
